<compile_context>
chip_gen: v6e
topology: v6e:2x2x1
jax: 0.10.0
libtpu: 0.0.40
codegen_flags: <defaults>
</compile_context>

<pallas_src>
import math
import functools

import jax
import jax.numpy as jnp
from jax.experimental import pallas as pl
from jax.experimental.pallas import tpu as pltpu


# ----------------------------------------------------------------------------
# Fused kernel — per grid step g, process Bt packed batches (R = Bt*Sp rows):
#   kv    = x @ [Wk|Wv] + [bk|bv]                       (bf16 MXU, f32 acc)
#   per-head cosine via two tiny reductions against the 0/1 head selector (bf16)
#   p     = exp(|cos|)                                  (eval: mask all ones, no dropout)
#   value = (p @ hselT) * v                             (R, D), never leaves VMEM
#   out_g = Pm_g @ value                                (N, D) per-block scatter, no RMW
# ----------------------------------------------------------------------------
def _fused_bert_pool_kernel(x_ref, q_ref, qn2_ref, pm_ref, e_ref,
                            wkv_ref, bkv_ref, hsel_ref, hselT_ref, out_ref):
    D = wkv_ref.shape[0]

    x = x_ref[0]                                   # (R, D)  bf16
    e = e_ref[...]                                 # (R, Bt) bf16 0/1 row->batch selector

    # Fused K|V projection: one bf16 MXU matmul, f32 accumulation, one fused bias add.
    kv = jnp.dot(x, wkv_ref[...], preferred_element_type=jnp.float32) + bkv_ref[...]  # (R, 2D)
    k = kv[:, :D]
    v = kv[:, D:]

    # Broadcast the hoisted per-batch query / |q|^2 to their Sp rows (bf16 0/1 selector).
    q_rows = jnp.dot(e, q_ref[0], preferred_element_type=jnp.float32)      # (R, D)
    qn2_rows = jnp.dot(e, qn2_ref[0], preferred_element_type=jnp.float32)  # (R, h)

    # Per-head reductions: bf16 operands (0/1 selector is exact in bf16), f32 accumulation.
    # Two dots against the same selector (no (2R, D) concat copy).
    hsel = hsel_ref[...]                                                   # (D, h)
    qk = jnp.dot((k * q_rows).astype(jnp.bfloat16), hsel,
                 preferred_element_type=jnp.float32)                       # (R, h) dot(q, k)
    kn2 = jnp.dot((k * k).astype(jnp.bfloat16), hsel,
                  preferred_element_type=jnp.float32)                      # (R, h) |k|^2

    # cos = qk / max(|q||k|, 1e-8)  ->  qk * rsqrt(max(|q|^2 |k|^2, 1e-16));  EUP rsqrt, f32.
    p = jnp.exp(jnp.abs(qk * jax.lax.rsqrt(jnp.maximum(qn2_rows * kn2, 1e-16))))   # (R, h)

    # Broadcast the per-head prob to its d_k channels and scale v.
    p_full = jnp.dot(p.astype(jnp.bfloat16), hselT_ref[...],
                     preferred_element_type=jnp.float32)                   # (R, D)
    value = (p_full * v).astype(jnp.bfloat16)                              # (R, D)

    # ROI pooling as a bf16 0/1-mask matmul (1/len applied once in the wrapper).  Each ROI
    # lives in exactly one block -> plain per-block store, no accumulator / RMW / init.
    out_ref[0] = jnp.dot(pm_ref[0], value, preferred_element_type=jnp.float32)     # (N, D)


# ----------------------------------------------------------------------------
# Wrapper: layout glue, hoisted query projection, mask-matrix construction.
# TODO(synk): `avr(1)` is not defined in the provided source; ROI pooling is implemented as
#             an inclusive temporal mean over value[b, start:end+1, :] (empty ROI -> 0, not
#             NaN as an empty PyTorch mean would give).
# ----------------------------------------------------------------------------
def bert_pool_forward(params, input_vectors, clstoken_scales, rois, attn_heads=8,
                      row_budget=512):
    # row_budget ~512-1024 on v5e/v6e (128 MiB VMEM); keep ~256-512 on v7x (64 MiB VMEM).
    Wq, bq, Wk, bk, Wv, bv = params
    B, D, L = input_vectors.shape
    S = L + 1
    h = attn_heads
    d_k = D // h
    N = rois.shape[0]

    # x = cat(clstoken_scales, input_vectors.permute(0,2,1)) -> (B, S, D)
    x = jnp.concatenate(
        [clstoken_scales[:, None, :], jnp.transpose(input_vectors, (0, 2, 1))],
        axis=1).astype(jnp.float32)

    # Hoisted query projection + per-head squared query norms (a 1-row matmul per batch
    # would be pure MXU drain latency inside the kernel).
    q = x[:, 0, :] @ Wq + bq[0]                                   # (B, D)
    qn2 = jnp.sum((q * q).reshape(B, h, d_k), axis=-1)            # (B, h)

    # Pad the sequence dim so R = Bt*Sp is a multiple of 8 (no masked partial sublanes).
    Sp = -(-S // 8) * 8
    x = jnp.pad(x, ((0, 0), (0, Sp - S), (0, 0)))

    # Batch packing: Bt batches per grid step, flattened to R = Bt*Sp MXU rows.
    bt = max(1, min(B, row_budget // Sp))
    G = -(-B // bt)                                               # ceil-div
    padB = G * bt - B
    xp = jnp.pad(x, ((0, padB), (0, 0), (0, 0)))
    qp = jnp.pad(q, ((0, padB), (0, 0)))
    qn2p = jnp.pad(qn2, ((0, padB), (0, 0)))

    R = bt * Sp
    x_blk = xp.reshape(G, R, D).astype(jnp.bfloat16)              # bf16 feed to the MXU
    q_blk = qp.reshape(G, bt, D).astype(jnp.bfloat16)
    qn2_blk = qn2p.reshape(G, bt, h).astype(jnp.bfloat16)

    # Fused K|V weight / bias.
    Wkv = jnp.concatenate([Wk, Wv], axis=1).astype(jnp.bfloat16)  # (D, 2D)
    bkv = jnp.concatenate([bk, bv], axis=1).astype(jnp.float32)   # (1, 2D)

    # Head selector (D, h): hsel[c, head] = 1 iff c // d_k == head (0/1 -> exact in bf16).
    hsel = jnp.repeat(jnp.eye(h, dtype=jnp.bfloat16), d_k, axis=0)
    hselT = hsel.T

    # Row -> in-block batch broadcast matrix (R, Bt), 0/1 bf16.
    E = (jnp.arange(R)[:, None] // Sp == jnp.arange(bt)[None, :]).astype(jnp.bfloat16)

    # ROI membership mask (G, N, R), 0/1 bf16: row r of block g belongs to ROI j iff it is in
    # ROI j's batch and start+1 <= seq <= end+1 (+1 for the prepended CLS slot).
    rois = rois.astype(jnp.int32)
    b_idx = rois[:, 0]
    s0 = rois[:, 1] + 1
    s1 = rois[:, 2] + 1
    cnt = jnp.maximum(s1 - s0 + 1, 1).astype(jnp.float32)         # clamp keeps empty ROIs -> 0
    r = jnp.arange(R)
    gb = jnp.arange(G)[:, None, None] * bt + (r // Sp)[None, None, :]   # global batch of row r
    sq = (r % Sp)[None, None, :]                                        # seq position of row r
    Pm = ((gb == b_idx[None, :, None])
          & (sq >= s0[None, :, None])
          & (sq <= s1[None, :, None])).astype(jnp.bfloat16)

    full = lambda shape: pl.BlockSpec(shape, lambda g: (0,) * len(shape))

    out_blocks = pl.pallas_call(
        _fused_bert_pool_kernel,
        out_shape=jax.ShapeDtypeStruct((G, N, D), jnp.float32),
        grid_spec=pltpu.PrefetchScalarGridSpec(
            num_scalar_prefetch=0,
            grid=(G,),
            in_specs=[
                pl.BlockSpec((1, R, D), lambda g: (g, 0, 0)),     # x (packed batches)
                pl.BlockSpec((1, bt, D), lambda g: (g, 0, 0)),    # q (hoisted)
                pl.BlockSpec((1, bt, h), lambda g: (g, 0, 0)),    # |q|^2 per head (hoisted)
                pl.BlockSpec((1, N, R), lambda g: (g, 0, 0)),     # ROI 0/1 mask
                full((R, bt)),                                    # E
                full((D, 2 * D)), full((1, 2 * D)),               # Wk|Wv, bk|bv
                full((D, h)), full((h, D)),                       # hsel, hselT
            ],
            # Per-block scatter output: each block writes its own (N, D) slab exactly once.
            out_specs=pl.BlockSpec((1, N, D), lambda g: (g, 0, 0)),
        ),
        compiler_params=pltpu.CompilerParams(
            dimension_semantics=("parallel",),          # independent blocks -> megacore on v7x
            vmem_limit_bytes=32 * 1024 * 1024),         # safe on all gens; raise on v5e/v6e
    )(x_blk, q_blk, qn2_blk, Pm, E, Wkv, bkv, hsel, hselT)

    # Each ROI lives in exactly one block g = batch // Bt; gather its row back into original
    # ROI order and apply the 1/len pooling scale once, in f32.
    g_of = b_idx // bt
    pooled = out_blocks[g_of, jnp.arange(N), :] / cnt[:, None]
    # pool_value.view(N, attn_heads, -1).view(N, -1) == (N, D) with c = head*d_k + j
    return pooled


# ----------------------------------------------------------------------------
# Pure-JAX f32 reference (mirrors the PyTorch eval-mode forward) for a sanity check.
# ----------------------------------------------------------------------------
def _reference(params, input_vectors, clstoken_scales, rois, attn_heads):
    Wq, bq, Wk, bk, Wv, bv = params
    B, D, L = input_vectors.shape
    S, h, d_k = L + 1, attn_heads, D // attn_heads
    x = jnp.concatenate(
        [clstoken_scales[:, None, :], jnp.transpose(input_vectors, (0, 2, 1))], axis=1)
    q = x[:, 0, :] @ Wq + bq[0]
    k = x @ Wk + bk[0]
    v = x @ Wv + bv[0]
    qh = q.reshape(B, h, d_k)
    kh = k.reshape(B, S, h, d_k)
    vh = v.reshape(B, S, h, d_k)
    dot = jnp.einsum("bhd,bshd->bsh", qh, kh)
    qn = jnp.sqrt(jnp.sum(qh * qh, -1))
    kn = jnp.sqrt(jnp.sum(kh * kh, -1))
    cos = dot / jnp.maximum(qn[:, None, :] * kn, 1e-8)
    p = jnp.exp(jnp.abs(cos))
    val = (p[..., None] * vh).reshape(B, S, D)
    outs = []
    for r in rois:
        b, s0, s1 = int(r[0]), int(r[1]) + 1, int(r[2]) + 1
        outs.append(val[b, s0:s1 + 1].mean(axis=0))
    return jnp.stack(outs)


if __name__ == "__main__":
    B, D, L, h = 2, 32, 8, 8          # batch, input_dim, max_len, attn_heads
    key = jax.random.PRNGKey(0)
    ks = jax.random.split(key, 9)

    bound = 1.0 / math.sqrt(D)        # nn.Linear default init bound
    Wq = jax.random.uniform(ks[0], (D, D), jnp.float32, -bound, bound)
    bq = jax.random.uniform(ks[1], (1, D), jnp.float32, -bound, bound)
    Wk = jax.random.uniform(ks[2], (D, D), jnp.float32, -bound, bound)
    bk = jax.random.uniform(ks[3], (1, D), jnp.float32, -bound, bound)
    Wv = jax.random.uniform(ks[4], (D, D), jnp.float32, -bound, bound)
    bv = jax.random.uniform(ks[5], (1, D), jnp.float32, -bound, bound)
    params = (Wq, bq, Wk, bk, Wv, bv)
    # clsToken / a_2 / b_2 parameters of the module are unused in forward -> not materialized.

    input_vectors = jax.random.normal(ks[6], (B, D, L), jnp.float32)   # (B, input_dim, max_len)
    clstoken_scales = jax.random.normal(ks[7], (B, D), jnp.float32)    # (B, input_dim)
    rois = jnp.array([[0, 0, 3],
                      [1, 2, 7],
                      [0, 5, 5]], dtype=jnp.int32)                     # [batch_idx, start, end]

    fwd = jax.jit(functools.partial(bert_pool_forward, attn_heads=h))
    out = jax.block_until_ready(fwd(params, input_vectors, clstoken_scales, rois))

    ref = _reference(params, input_vectors, clstoken_scales, rois, h)
    assert out.shape == (rois.shape[0], D), out.shape
    # bf16 MXU feed of x/Wkv plus bf16-cast glue matmuls vs. the f32 reference -> ~1e-2 drift.
    assert jnp.allclose(out, ref, rtol=3e-2, atol=3e-2), float(jnp.max(jnp.abs(out - ref)))

    print("KERNEL_OK")
</pallas_src>

<mosaic_0001>
module attributes {stable_mosaic.version = 11 : i64} {
  func.func @_fused_bert_pool_kernel(%arg0: i32, %arg1: memref<1x32x32xbf16, #tpu.memory_space<vmem>>, %arg2: memref<1x2x32xbf16, #tpu.memory_space<vmem>>, %arg3: memref<1x2x8xbf16, #tpu.memory_space<vmem>>, %arg4: memref<1x3x32xbf16, #tpu.memory_space<vmem>>, %arg5: memref<32x2xbf16, #tpu.memory_space<vmem>>, %arg6: memref<32x64xbf16, #tpu.memory_space<vmem>>, %arg7: memref<1x64xf32, #tpu.memory_space<vmem>>, %arg8: memref<32x8xbf16, #tpu.memory_space<vmem>>, %arg9: memref<8x32xbf16, #tpu.memory_space<vmem>>, %arg10: memref<1x3x32xf32, #tpu.memory_space<vmem>>) attributes {dimension_semantics = [#tpu.dimension_semantics<parallel>], iteration_bounds = array<i64: 1>, scalar_prefetch = 0 : i64, scratch_operands = 0 : i64, tpu.core_type = #tpu.core_type<tc>, window_params = [{transform_indices = @transform_0, window_bounds = array<i64: 1, 32, 32>}, {transform_indices = @transform_1, window_bounds = array<i64: 1, 2, 32>}, {transform_indices = @transform_2, window_bounds = array<i64: 1, 2, 8>}, {transform_indices = @transform_3, window_bounds = array<i64: 1, 3, 32>}, {pipeline_mode = #tpu.pipeline_mode<synchronous>, transform_indices = @transform_4, window_bounds = array<i64: 32, 2>}, {pipeline_mode = #tpu.pipeline_mode<synchronous>, transform_indices = @transform_5, window_bounds = array<i64: 32, 64>}, {pipeline_mode = #tpu.pipeline_mode<synchronous>, transform_indices = @transform_6, window_bounds = array<i64: 1, 64>}, {pipeline_mode = #tpu.pipeline_mode<synchronous>, transform_indices = @transform_7, window_bounds = array<i64: 32, 8>}, {pipeline_mode = #tpu.pipeline_mode<synchronous>, transform_indices = @transform_8, window_bounds = array<i64: 8, 32>}, {transform_indices = @transform_9, window_bounds = array<i64: 1, 3, 32>}]} {
    %c0 = arith.constant 0 : index
    %c0_0 = arith.constant 0 : index
    %c0_1 = arith.constant 0 : index
    %0 = vector.load %arg1[%c0, %c0_0, %c0_1] : memref<1x32x32xbf16, #tpu.memory_space<vmem>>, vector<1x32x32xbf16>
    %1 = vector.shape_cast %0 : vector<1x32x32xbf16> to vector<32x32xbf16>
    %c0_2 = arith.constant 0 : index
    %c0_3 = arith.constant 0 : index
    %2 = vector.load %arg5[%c0_2, %c0_3] : memref<32x2xbf16, #tpu.memory_space<vmem>>, vector<32x2xbf16>
    %c0_4 = arith.constant 0 : index
    %c0_5 = arith.constant 0 : index
    %3 = vector.load %arg6[%c0_4, %c0_5] : memref<32x64xbf16, #tpu.memory_space<vmem>>, vector<32x64xbf16>
    %cst = arith.constant dense<0.000000e+00> : vector<32x64xf32>
    %4 = tpu.matmul %1, %3, %cst {dimension_numbers = #tpu.dot_dimension_numbers<[1], [0], [0], [1], [0, 0, 1, 1], [], []>} : vector<32x32xbf16>, vector<32x64xbf16>, vector<32x64xf32> -> vector<32x64xf32>
    %c0_6 = arith.constant 0 : index
    %c0_7 = arith.constant 0 : index
    %5 = vector.load %arg7[%c0_6, %c0_7] : memref<1x64xf32, #tpu.memory_space<vmem>>, vector<1x64xf32>
    %6 = vector.broadcast %5 : vector<1x64xf32> to vector<32x64xf32>
    %7 = arith.addf %4, %6 : vector<32x64xf32>
    %8 = vector.extract_strided_slice %7 {offsets = [0, 0], sizes = [32, 32], strides = [1, 1]} : vector<32x64xf32> to vector<32x32xf32>
    %9 = vector.extract_strided_slice %7 {offsets = [0, 32], sizes = [32, 32], strides = [1, 1]} : vector<32x64xf32> to vector<32x32xf32>
    %c0_8 = arith.constant 0 : index
    %c0_9 = arith.constant 0 : index
    %c0_10 = arith.constant 0 : index
    %10 = vector.load %arg2[%c0_8, %c0_9, %c0_10] : memref<1x2x32xbf16, #tpu.memory_space<vmem>>, vector<1x2x32xbf16>
    %11 = vector.shape_cast %10 : vector<1x2x32xbf16> to vector<2x32xbf16>
    %cst_11 = arith.constant dense<0.000000e+00> : vector<32x32xf32>
    %12 = tpu.matmul %2, %11, %cst_11 {dimension_numbers = #tpu.dot_dimension_numbers<[1], [0], [0], [1], [0, 0, 1, 1], [], []>} : vector<32x2xbf16>, vector<2x32xbf16>, vector<32x32xf32> -> vector<32x32xf32>
    %c0_12 = arith.constant 0 : index
    %c0_13 = arith.constant 0 : index
    %c0_14 = arith.constant 0 : index
    %13 = vector.load %arg3[%c0_12, %c0_13, %c0_14] : memref<1x2x8xbf16, #tpu.memory_space<vmem>>, vector<1x2x8xbf16>
    %14 = vector.shape_cast %13 : vector<1x2x8xbf16> to vector<2x8xbf16>
    %cst_15 = arith.constant dense<0.000000e+00> : vector<32x8xf32>
    %15 = tpu.matmul %2, %14, %cst_15 {dimension_numbers = #tpu.dot_dimension_numbers<[1], [0], [0], [1], [0, 0, 1, 1], [], []>} : vector<32x2xbf16>, vector<2x8xbf16>, vector<32x8xf32> -> vector<32x8xf32>
    %c0_16 = arith.constant 0 : index
    %c0_17 = arith.constant 0 : index
    %16 = vector.load %arg8[%c0_16, %c0_17] : memref<32x8xbf16, #tpu.memory_space<vmem>>, vector<32x8xbf16>
    %17 = arith.mulf %8, %12 : vector<32x32xf32>
    %18 = arith.truncf %17 : vector<32x32xf32> to vector<32x32xbf16>
    %cst_18 = arith.constant dense<0.000000e+00> : vector<32x8xf32>
    %19 = tpu.matmul %18, %16, %cst_18 {dimension_numbers = #tpu.dot_dimension_numbers<[1], [0], [0], [1], [0, 0, 1, 1], [], []>} : vector<32x32xbf16>, vector<32x8xbf16>, vector<32x8xf32> -> vector<32x8xf32>
    %20 = arith.mulf %8, %8 : vector<32x32xf32>
    %21 = arith.truncf %20 : vector<32x32xf32> to vector<32x32xbf16>
    %cst_19 = arith.constant dense<0.000000e+00> : vector<32x8xf32>
    %22 = tpu.matmul %21, %16, %cst_19 {dimension_numbers = #tpu.dot_dimension_numbers<[1], [0], [0], [1], [0, 0, 1, 1], [], []>} : vector<32x32xbf16>, vector<32x8xbf16>, vector<32x8xf32> -> vector<32x8xf32>
    %23 = arith.mulf %15, %22 : vector<32x8xf32>
    %cst_20 = arith.constant 1.000000e-16 : f32
    %24 = vector.broadcast %cst_20 : f32 to vector<32x8xf32>
    %25 = arith.maximumf %23, %24 : vector<32x8xf32>
    %26 = math.rsqrt %25 : vector<32x8xf32>
    %27 = arith.mulf %19, %26 : vector<32x8xf32>
    %28 = math.absf %27 : vector<32x8xf32>
    %29 = math.exp %28 : vector<32x8xf32>
    %30 = arith.truncf %29 : vector<32x8xf32> to vector<32x8xbf16>
    %c0_21 = arith.constant 0 : index
    %c0_22 = arith.constant 0 : index
    %31 = vector.load %arg9[%c0_21, %c0_22] : memref<8x32xbf16, #tpu.memory_space<vmem>>, vector<8x32xbf16>
    %cst_23 = arith.constant dense<0.000000e+00> : vector<32x32xf32>
    %32 = tpu.matmul %30, %31, %cst_23 {dimension_numbers = #tpu.dot_dimension_numbers<[1], [0], [0], [1], [0, 0, 1, 1], [], []>} : vector<32x8xbf16>, vector<8x32xbf16>, vector<32x32xf32> -> vector<32x32xf32>
    %33 = arith.mulf %32, %9 : vector<32x32xf32>
    %34 = arith.truncf %33 : vector<32x32xf32> to vector<32x32xbf16>
    %c0_24 = arith.constant 0 : index
    %c0_25 = arith.constant 0 : index
    %c0_26 = arith.constant 0 : index
    %35 = vector.load %arg4[%c0_24, %c0_25, %c0_26] : memref<1x3x32xbf16, #tpu.memory_space<vmem>>, vector<1x3x32xbf16>
    %36 = vector.shape_cast %35 : vector<1x3x32xbf16> to vector<3x32xbf16>
    %cst_27 = arith.constant dense<0.000000e+00> : vector<3x32xf32>
    %37 = tpu.matmul %36, %34, %cst_27 {dimension_numbers = #tpu.dot_dimension_numbers<[1], [0], [0], [1], [0, 0, 1, 1], [], []>} : vector<3x32xbf16>, vector<32x32xbf16>, vector<3x32xf32> -> vector<3x32xf32>
    %c0_28 = arith.constant 0 : index
    %c0_29 = arith.constant 0 : index
    %c0_30 = arith.constant 0 : index
    %38 = vector.load %arg10[%c0_28, %c0_29, %c0_30] : memref<1x3x32xf32, #tpu.memory_space<vmem>>, vector<1x3x32xf32>
    %39 = vector.shape_cast %38 : vector<1x3x32xf32> to vector<3x32xf32>
    %40 = vector.shape_cast %37 : vector<3x32xf32> to vector<1x3x32xf32>
    tpu.vector_store %arg10[%c0_28, %c0_29, %c0_30], %40 {strides = array<i32>} : memref<1x3x32xf32, #tpu.memory_space<vmem>>, vector<1x3x32xf32>,
    return
  }
  func.func @transform_0(%arg0: i32) -> (i32, i32, i32) {
    %c0_i32 = arith.constant 0 : i32
    %c0_i32_0 = arith.constant 0 : i32
    %c0_i32_1 = arith.constant 0 : i32
    return %arg0, %c0_i32, %c0_i32_0 : i32, i32, i32
  }
  func.func @transform_1(%arg0: i32) -> (i32, i32, i32) {
    %c0_i32 = arith.constant 0 : i32
    %c0_i32_0 = arith.constant 0 : i32
    %c0_i32_1 = arith.constant 0 : i32
    return %arg0, %c0_i32, %c0_i32_0 : i32, i32, i32
  }
  func.func @transform_2(%arg0: i32) -> (i32, i32, i32) {
    %c0_i32 = arith.constant 0 : i32
    %c0_i32_0 = arith.constant 0 : i32
    %c0_i32_1 = arith.constant 0 : i32
    return %arg0, %c0_i32, %c0_i32_0 : i32, i32, i32
  }
  func.func @transform_3(%arg0: i32) -> (i32, i32, i32) {
    %c0_i32 = arith.constant 0 : i32
    %c0_i32_0 = arith.constant 0 : i32
    %c0_i32_1 = arith.constant 0 : i32
    return %arg0, %c0_i32, %c0_i32_0 : i32, i32, i32
  }
  func.func @transform_4(%arg0: i32) -> (i32, i32) {
    %c0_i32 = arith.constant 0 : i32
    %c0_i32_0 = arith.constant 0 : i32
    %c0_i32_1 = arith.constant 0 : i32
    return %c0_i32, %c0_i32_0 : i32, i32
  }
  func.func @transform_5(%arg0: i32) -> (i32, i32) {
    %c0_i32 = arith.constant 0 : i32
    %c0_i32_0 = arith.constant 0 : i32
    %c0_i32_1 = arith.constant 0 : i32
    return %c0_i32, %c0_i32_0 : i32, i32
  }
  func.func @transform_6(%arg0: i32) -> (i32, i32) {
    %c0_i32 = arith.constant 0 : i32
    %c0_i32_0 = arith.constant 0 : i32
    %c0_i32_1 = arith.constant 0 : i32
    return %c0_i32, %c0_i32_0 : i32, i32
  }
  func.func @transform_7(%arg0: i32) -> (i32, i32) {
    %c0_i32 = arith.constant 0 : i32
    %c0_i32_0 = arith.constant 0 : i32
    %c0_i32_1 = arith.constant 0 : i32
    return %c0_i32, %c0_i32_0 : i32, i32
  }
  func.func @transform_8(%arg0: i32) -> (i32, i32) {
    %c0_i32 = arith.constant 0 : i32
    %c0_i32_0 = arith.constant 0 : i32
    %c0_i32_1 = arith.constant 0 : i32
    return %c0_i32, %c0_i32_0 : i32, i32
  }
  func.func @transform_9(%arg0: i32) -> (i32, i32, i32) {
    %c0_i32 = arith.constant 0 : i32
    %c0_i32_0 = arith.constant 0 : i32
    %c0_i32_1 = arith.constant 0 : i32
    return %arg0, %c0_i32, %c0_i32_0 : i32, i32, i32
  }
}

</mosaic_0001>

<llo_original>
// kernel: bert_pool_forward.1
$region0: #{bert_pool_forward.1}
  #allocation0 [shape = 'u32[]', space=smem, size = 0x4, offset = 0x4, fixed_abs, tag = 'smem constant byte address 0x4 - core index']
  #allocation1 [shape = 'u32[144,128]{1,0:T(1,128)}', space=vmem, size = 0x12000, scoped, tag = 'internal scratch']
  %s0 = inlined_call_operand.vmem [shape: bf16[1,32,32], index: 0, kind: input, shape index: {}]
  %s1 = inlined_call_operand.vmem [shape: bf16[1,2,32], index: 1, kind: input, shape index: {}]
  %s2 = inlined_call_operand.vmem [shape: bf16[1,2,8], index: 2, kind: input, shape index: {}]
  %s3 = inlined_call_operand.vmem [shape: bf16[1,3,32], index: 3, kind: input, shape index: {}]
  %s4 = inlined_call_operand.vmem [shape: bf16[32,2], index: 4, kind: input, shape index: {}]
  %s5 = inlined_call_operand.vmem [shape: bf16[32,64], index: 5, kind: input, shape index: {}]
  %s6 = inlined_call_operand.vmem [shape: f32[1,64], index: 6, kind: input, shape index: {}]
  %s7 = inlined_call_operand.vmem [shape: bf16[32,8], index: 7, kind: input, shape index: {}]
  %s8 = inlined_call_operand.vmem [shape: bf16[8,32], index: 8, kind: input, shape index: {}]
  %s9 = inlined_call_operand.vmem [shape: f32[1,3,32], index: 9, kind: output, shape index: {}]
  %s10 = sld [smem:[#allocation0]]
  $region46: #{bert_pool_forward.1} parent=0
    _
  %s12 = ssub.s32 1, %s10
  %s13 = scalar_select 0, %s12, %s10
  // Predicated region
  $region2: #{bert_pool_forward.1} parent=0 // pred_check
    _
  $region3: #{bert_pool_forward.1} parent=0 // pred_check_branch
    %15 = sbr.rel (0) target = $region5
  $region4: #{bert_pool_forward.1} parent=0 // pred_region
    _
  $region5: #{bert_pool_forward.1} parent=0 // pred_fallthru
    _
  // Predicated region
  $region6: #{bert_pool_forward.1} parent=0 // pred_check
    _
  $region7: #{bert_pool_forward.1} parent=0 // pred_check_branch
    %17 = sbr.rel (0) target = $region9
  $region8: #{bert_pool_forward.1} parent=0 // pred_region
    _
  $region9: #{bert_pool_forward.1} parent=0 // pred_fallthru
    _
  // Predicated region
  $region10: #{bert_pool_forward.1} parent=0 // pred_check
    _
  $region11: #{bert_pool_forward.1} parent=0 // pred_check_branch
    %19 = sbr.rel (0) target = $region13
  $region12: #{bert_pool_forward.1} parent=0 // pred_region
    _
  $region13: #{bert_pool_forward.1} parent=0 // pred_fallthru
    _
  // Predicated region
  $region14: #{bert_pool_forward.1} parent=0 // pred_check
    _
  $region15: #{bert_pool_forward.1} parent=0 // pred_check_branch
    %21 = sbr.rel (0) target = $region17
  $region16: #{bert_pool_forward.1} parent=0 // pred_region
    _
  $region17: #{bert_pool_forward.1} parent=0 // pred_fallthru
    _
  // Predicated region
  $region18: #{bert_pool_forward.1} parent=0 // pred_check
    _
  $region19: #{bert_pool_forward.1} parent=0 // pred_check_branch
    %23 = sbr.rel (0) target = $region21
  $region20: #{bert_pool_forward.1} parent=0 // pred_region
    _
  $region21: #{bert_pool_forward.1} parent=0 // pred_fallthru
    _
  // Predicated region
  $region22: #{bert_pool_forward.1} parent=0 // pred_check
    _
  $region23: #{bert_pool_forward.1} parent=0 // pred_check_branch
    %25 = sbr.rel (0) target = $region25
  $region24: #{bert_pool_forward.1} parent=0 // pred_region
    _
  $region25: #{bert_pool_forward.1} parent=0 // pred_fallthru
    _
  // Predicated region
  $region26: #{bert_pool_forward.1} parent=0 // pred_check
    _
  $region27: #{bert_pool_forward.1} parent=0 // pred_check_branch
    %27 = sbr.rel (0) target = $region29
  $region28: #{bert_pool_forward.1} parent=0 // pred_region
    _
  $region29: #{bert_pool_forward.1} parent=0 // pred_fallthru
    _
  // Predicated region
  $region30: #{bert_pool_forward.1} parent=0 // pred_check
    _
  $region31: #{bert_pool_forward.1} parent=0 // pred_check_branch
    %29 = sbr.rel (0) target = $region33
  $region32: #{bert_pool_forward.1} parent=0 // pred_region
    _
  $region33: #{bert_pool_forward.1} parent=0 // pred_fallthru
    _
  // Predicated region
  $region34: #{bert_pool_forward.1} parent=0 // pred_check
    _
  $region35: #{bert_pool_forward.1} parent=0 // pred_check_branch
    %31 = sbr.rel (0) target = $region37
  $region36: #{bert_pool_forward.1} parent=0 // pred_region
    _
  $region37: #{bert_pool_forward.1} parent=0 // pred_fallthru
    _
  %v33 = vld [vmem:[%s0] sm:$0xf]
  %v34 = vld [vmem:[%s0 + $0x4] sm:$0xf]
  %v35 = vld [vmem:[%s0 + $0x8] sm:$0xf]
  %v36 = vld [vmem:[%s0 + $0xc] sm:$0xf]
  %v37 = vld [vmem:[%s4] sm:$0xf]
  %v38 = vld [vmem:[%s4 + $0x4] sm:$0xf]
  %v39 = vld [vmem:[%s4 + $0x8] sm:$0xf]
  %v40 = vld [vmem:[%s4 + $0xc] sm:$0xf]
  %v41 = vld [vmem:[%s5] sm:$0xf]
  %v42 = vld [vmem:[%s5 + $0x4] sm:$0xf]
  %v43 = vld [vmem:[%s5 + $0x8] sm:$0xf]
  %v44 = vld [vmem:[%s5 + $0xc] sm:$0xf]
  %v45 = vld [vmem:[%s6] sm:$0x1]
  %v47 = vlaneseq
  %v48 = vshrl.u32 %v47, 7
  %v49 = vsub.s32 0, %v48
  %v50 = vrot.slane %v45, %v49
  %v56 = vunpack.c.l.b16 %v33
  %v57 = vunpack.c.l.b16 %v34
  %v58 = vunpack.c.l.b16 %v35
  %v59 = vunpack.c.l.b16 %v36
  %v60 = vpack.c.b16 %v57, %v56
  %v61 = vpack.c.b16 %v59, %v58
  %v66 = vunpack.c.l.b16 %v41
  %v67 = vunpack.c.l.b16 %v42
  %v68 = vunpack.c.l.b16 %v43
  %v69 = vunpack.c.l.b16 %v44
  %v70 = vpack.c.b16 %v67, %v66
  %v71 = vpack.c.b16 %v69, %v68
  %vm74 = vcmask 261120
  %v76 = vsel %vm74, %v60, 0
  %v79 = vsel %vm74, %v61, 0
  %81 = vmatprep.subr.bf16.mxu0 0
  %82 = vmatpush1.bf16.msra.mxu0 0
  %83 = vmatprep.subr.bf16.mxu0 0
  %84 = vmatpush1.bf16.msra.mxu0 0
  %85 = vmatprep.subr.bf16.mxu0 0
  %86 = vmatpush1.bf16.msra.mxu0 0
  %87 = vmatprep.subr.bf16.mxu0 0
  %88 = vmatpush1.bf16.msra.mxu0 0
  %89 = vmatprep.subr.bf16.mxu0 0
  %90 = vmatpush1.bf16.msra.mxu0 0
  %91 = vmatprep.subr.bf16.mxu0 0
  %92 = vmatpush1.bf16.msra.mxu0 0
  %93 = vmatprep.subr.bf16.mxu0 0
  %94 = vmatpush1.bf16.msra.mxu0 %v71
  %95 = vmatprep.subr.bf16.mxu0 0
  %96 = vmatpush1.bf16.msra.mxu0 %v70
  %97 = vmatprep.subr.bf16.mxu0 0
  %98 = vmatpush2.bf16.msra.mxu0 0
  %99 = vmatprep.subr.bf16.mxu0 0
  %100 = vmatpush2.bf16.msra.mxu0 0
  %101 = vmatprep.subr.bf16.mxu0 0
  %102 = vmatpush2.bf16.msra.mxu0 0
  %103 = vmatprep.subr.bf16.mxu0 0
  %104 = vmatpush2.bf16.msra.mxu0 0
  %105 = vmatprep.subr.bf16.mxu0 0
  %106 = vmatpush2.bf16.msra.mxu0 0
  %107 = vmatprep.subr.bf16.mxu0 0
  %108 = vmatpush2.bf16.msra.mxu0 0
  %109 = vmatprep.subr.bf16.mxu0 0
  %110 = vmatpush2.bf16.msra.mxu0 0
  %111 = vmatprep.subr.bf16.mxu0 0
  %112 = vmatpush2.bf16.msra.mxu0 0
  %113 = vmatprep.mubr.bf16.mxu0 0
  %114 = vmatmul.mubr.bf16.gmra.mxu0 %v76
  %v115 = vpop.f32.mrf.mxu0
  %v116 = vadd.f32 %v50, %v115
  %v117 = vpop.f32.mrf.mxu0
  %v118 = vpop.f32.mrf.mxu0
  %v119 = vadd.f32 %v50, %v118
  %v120 = vpop.f32.mrf.mxu0
  %121 = vmatprep.mubr.bf16.mxu0 0
  %122 = vmatmul.mubr.bf16.gmra.mxu0 %v79
  %v123 = vpop.f32.mrf.mxu0
  %v124 = vadd.f32 %v50, %v123
  %v125 = vpop.f32.mrf.mxu0
  %v126 = vpop.f32.mrf.mxu0
  %v127 = vadd.f32 %v50, %v126
  %v128 = vpop.f32.mrf.mxu0
  %129 = vdwg.mxu0
  %v130 = vld [vmem:[%s1] sm:$0x1]
  %v135 = vunpack.c.l.b16 %v37
  %v136 = vunpack.c.l.b16 %v38
  %v137 = vunpack.c.l.b16 %v39
  %v138 = vunpack.c.l.b16 %v40
  %v139 = vpack.c.b16 %v136, %v135
  %v140 = vpack.c.b16 %v138, %v137
  %vm141 = vcmask 15360
  %v143 = vsel %vm141, %v139, 0
  %v146 = vsel %vm141, %v140, 0
  %vm148 = vcmask 1040384
  %v150 = vsel %vm148, %v130, 0
  %152 = vmatprep.subr.bf16.mxu0 0
  %153 = vmatpush1.bf16.msra.mxu0 0
  %154 = vmatprep.subr.bf16.mxu0 0
  %155 = vmatpush1.bf16.msra.mxu0 0
  %156 = vmatprep.subr.bf16.mxu0 0
  %157 = vmatpush1.bf16.msra.mxu0 0
  %158 = vmatprep.subr.bf16.mxu0 0
  %159 = vmatpush1.bf16.msra.mxu0 0
  %160 = vmatprep.subr.bf16.mxu0 0
  %161 = vmatpush1.bf16.msra.mxu0 0
  %162 = vmatprep.subr.bf16.mxu0 0
  %163 = vmatpush1.bf16.msra.mxu0 0
  %164 = vmatprep.subr.bf16.mxu0 0
  %165 = vmatpush1.bf16.msra.mxu0 0
  %166 = vmatprep.subr.bf16.mxu0 0
  %167 = vmatpush1.bf16.msra.mxu0 %v150
  %168 = vmatprep.subr.bf16.mxu0 0
  %169 = vmatpush2.bf16.msra.mxu0 0
  %170 = vmatprep.subr.bf16.mxu0 0
  %171 = vmatpush2.bf16.msra.mxu0 0
  %172 = vmatprep.subr.bf16.mxu0 0
  %173 = vmatpush2.bf16.msra.mxu0 0
  %174 = vmatprep.subr.bf16.mxu0 0
  %175 = vmatpush2.bf16.msra.mxu0 0
  %176 = vmatprep.subr.bf16.mxu0 0
  %177 = vmatpush2.bf16.msra.mxu0 0
  %178 = vmatprep.subr.bf16.mxu0 0
  %179 = vmatpush2.bf16.msra.mxu0 0
  %180 = vmatprep.subr.bf16.mxu0 0
  %181 = vmatpush2.bf16.msra.mxu0 0
  %182 = vmatprep.subr.bf16.mxu0 0
  %183 = vmatpush2.bf16.msra.mxu0 0
  %184 = vmatprep.mubr.bf16.mxu0 0
  %185 = vmatmul.mubr.bf16.gmra.mxu0 %v143
  %v186 = vpop.f32.mrf.mxu0
  %v187 = vadd.f32 0.0, %v186
  %v188 = vpop.f32.mrf.mxu0
  %v189 = vpop.f32.mrf.mxu0
  %v190 = vadd.f32 0.0, %v189
  %v191 = vpop.f32.mrf.mxu0
  %192 = vmatprep.mubr.bf16.mxu0 0
  %193 = vmatmul.mubr.bf16.gmra.mxu0 %v146
  %v194 = vpop.f32.mrf.mxu0
  %v195 = vadd.f32 0.0, %v194
  %v196 = vpop.f32.mrf.mxu0
  %v197 = vpop.f32.mrf.mxu0
  %v198 = vadd.f32 0.0, %v197
  %v199 = vpop.f32.mrf.mxu0
  %200 = vdwg.mxu0
  %v201 = vld [vmem:[%s2] sm:$0x1]
  %v203 = vsel %vm148, %v201, 0
  %205 = vmatprep.subr.bf16.mxu0 0
  %206 = vmatpush1.bf16.msra.mxu0 0
  %207 = vmatprep.subr.bf16.mxu0 0
  %208 = vmatpush1.bf16.msra.mxu0 0
  %209 = vmatprep.subr.bf16.mxu0 0
  %210 = vmatpush1.bf16.msra.mxu0 0
  %211 = vmatprep.subr.bf16.mxu0 0
  %212 = vmatpush1.bf16.msra.mxu0 0
  %213 = vmatprep.subr.bf16.mxu0 0
  %214 = vmatpush1.bf16.msra.mxu0 0
  %215 = vmatprep.subr.bf16.mxu0 0
  %216 = vmatpush1.bf16.msra.mxu0 0
  %217 = vmatprep.subr.bf16.mxu0 0
  %218 = vmatpush1.bf16.msra.mxu0 0
  %219 = vmatprep.subr.bf16.mxu0 0
  %220 = vmatpush1.bf16.msra.mxu0 %v203
  %221 = vmatprep.subr.bf16.mxu0 0
  %222 = vmatpush2.bf16.msra.mxu0 0
  %223 = vmatprep.subr.bf16.mxu0 0
  %224 = vmatpush2.bf16.msra.mxu0 0
  %225 = vmatprep.subr.bf16.mxu0 0
  %226 = vmatpush2.bf16.msra.mxu0 0
  %227 = vmatprep.subr.bf16.mxu0 0
  %228 = vmatpush2.bf16.msra.mxu0 0
  %229 = vmatprep.subr.bf16.mxu0 0
  %230 = vmatpush2.bf16.msra.mxu0 0
  %231 = vmatprep.subr.bf16.mxu0 0
  %232 = vmatpush2.bf16.msra.mxu0 0
  %233 = vmatprep.subr.bf16.mxu0 0
  %234 = vmatpush2.bf16.msra.mxu0 0
  %235 = vmatprep.subr.bf16.mxu0 0
  %236 = vmatpush2.bf16.msra.mxu0 0
  %237 = vmatprep.mubr.bf16.mxu0 0
  %238 = vmatmul.mubr.bf16.gmra.mxu0 %v143
  %v239 = vpop.f32.mrf.mxu0
  %v240 = vadd.f32 0.0, %v239
  %v241 = vpop.f32.mrf.mxu0
  %v242 = vpop.f32.mrf.mxu0
  %v243 = vadd.f32 0.0, %v242
  %v244 = vpop.f32.mrf.mxu0
  %245 = vmatprep.mubr.bf16.mxu0 0
  %246 = vmatmul.mubr.bf16.gmra.mxu0 %v146
  %v247 = vpop.f32.mrf.mxu0
  %v248 = vadd.f32 0.0, %v247
  %v249 = vpop.f32.mrf.mxu0
  %v250 = vpop.f32.mrf.mxu0
  %v251 = vadd.f32 0.0, %v250
  %v252 = vpop.f32.mrf.mxu0
  %253 = vdwg.mxu0
  %v254 = vld [vmem:[%s7] sm:$0xf]
  %v255 = vld [vmem:[%s7 + $0x4] sm:$0xf]
  %v256 = vld [vmem:[%s7 + $0x8] sm:$0xf]
  %v257 = vld [vmem:[%s7 + $0xc] sm:$0xf]
  %v258 = vmul.f32 %v116, %v187
  %v259 = vmul.f32 %v119, %v190
  %v260 = vmul.f32 %v124, %v195
  %v261 = vmul.f32 %v127, %v198
  %v262 = vpack.c.bf16 %v259, %v258
  %v263 = vpack.c.bf16 %v261, %v260
  %v268 = vunpack.c.l.b16 %v254
  %v269 = vunpack.c.l.b16 %v255
  %v270 = vunpack.c.l.b16 %v256
  %v271 = vunpack.c.l.b16 %v257
  %v272 = vpack.c.b16 %v269, %v268
  %v273 = vpack.c.b16 %v271, %v270
  %v277 = vsel %vm74, %v262, 0
  %v280 = vsel %vm74, %v263, 0
  %282 = vmatprep.subr.bf16.mxu0 0
  %283 = vmatpush1.bf16.msra.mxu0 0
  %284 = vmatprep.subr.bf16.mxu0 0
  %285 = vmatpush1.bf16.msra.mxu0 0
  %286 = vmatprep.subr.bf16.mxu0 0
  %287 = vmatpush1.bf16.msra.mxu0 0
  %288 = vmatprep.subr.bf16.mxu0 0
  %289 = vmatpush1.bf16.msra.mxu0 0
  %290 = vmatprep.subr.bf16.mxu0 0
  %291 = vmatpush1.bf16.msra.mxu0 0
  %292 = vmatprep.subr.bf16.mxu0 0
  %293 = vmatpush1.bf16.msra.mxu0 0
  %294 = vmatprep.subr.bf16.mxu0 0
  %295 = vmatpush1.bf16.msra.mxu0 %v273
  %296 = vmatprep.subr.bf16.mxu0 0
  %297 = vmatpush1.bf16.msra.mxu0 %v272
  %298 = vmatprep.subr.bf16.mxu0 0
  %299 = vmatpush2.bf16.msra.mxu0 0
  %300 = vmatprep.subr.bf16.mxu0 0
  %301 = vmatpush2.bf16.msra.mxu0 0
  %302 = vmatprep.subr.bf16.mxu0 0
  %303 = vmatpush2.bf16.msra.mxu0 0
  %304 = vmatprep.subr.bf16.mxu0 0
  %305 = vmatpush2.bf16.msra.mxu0 0
  %306 = vmatprep.subr.bf16.mxu0 0
  %307 = vmatpush2.bf16.msra.mxu0 0
  %308 = vmatprep.subr.bf16.mxu0 0
  %309 = vmatpush2.bf16.msra.mxu0 0
  %310 = vmatprep.subr.bf16.mxu0 0
  %311 = vmatpush2.bf16.msra.mxu0 0
  %312 = vmatprep.subr.bf16.mxu0 0
  %313 = vmatpush2.bf16.msra.mxu0 0
  %314 = vmatprep.mubr.bf16.mxu0 0
  %315 = vmatmul.mubr.bf16.gmra.mxu0 %v277
  %v316 = vpop.f32.mrf.mxu0
  %v317 = vadd.f32 0.0, %v316
  %v318 = vpop.f32.mrf.mxu0
  %v319 = vpop.f32.mrf.mxu0
  %v320 = vadd.f32 0.0, %v319
  %v321 = vpop.f32.mrf.mxu0
  %322 = vmatprep.mubr.bf16.mxu0 0
  %323 = vmatmul.mubr.bf16.gmra.mxu0 %v280
  %v324 = vpop.f32.mrf.mxu0
  %v325 = vadd.f32 0.0, %v324
  %v326 = vpop.f32.mrf.mxu0
  %v327 = vpop.f32.mrf.mxu0
  %v328 = vadd.f32 0.0, %v327
  %v329 = vpop.f32.mrf.mxu0
  %330 = vdwg.mxu0
  %v331 = vmul.f32 %v116, %v116
  %v332 = vmul.f32 %v119, %v119
  %v333 = vmul.f32 %v124, %v124
  %v334 = vmul.f32 %v127, %v127
  %v335 = vpack.c.bf16 %v332, %v331
  %v336 = vpack.c.bf16 %v334, %v333
  %v338 = vsel %vm74, %v335, 0
  %v341 = vsel %vm74, %v336, 0
  %343 = vmatprep.subr.bf16.mxu0 0
  %344 = vmatpush1.bf16.msra.mxu0 0
  %345 = vmatprep.subr.bf16.mxu0 0
  %346 = vmatpush1.bf16.msra.mxu0 0
  %347 = vmatprep.subr.bf16.mxu0 0
  %348 = vmatpush1.bf16.msra.mxu0 0
  %349 = vmatprep.subr.bf16.mxu0 0
  %350 = vmatpush1.bf16.msra.mxu0 0
  %351 = vmatprep.subr.bf16.mxu0 0
  %352 = vmatpush1.bf16.msra.mxu0 0
  %353 = vmatprep.subr.bf16.mxu0 0
  %354 = vmatpush1.bf16.msra.mxu0 0
  %355 = vmatprep.subr.bf16.mxu0 0
  %356 = vmatpush1.bf16.msra.mxu0 %v273
  %357 = vmatprep.subr.bf16.mxu0 0
  %358 = vmatpush1.bf16.msra.mxu0 %v272
  %359 = vmatprep.subr.bf16.mxu0 0
  %360 = vmatpush2.bf16.msra.mxu0 0
  %361 = vmatprep.subr.bf16.mxu0 0
  %362 = vmatpush2.bf16.msra.mxu0 0
  %363 = vmatprep.subr.bf16.mxu0 0
  %364 = vmatpush2.bf16.msra.mxu0 0
  %365 = vmatprep.subr.bf16.mxu0 0
  %366 = vmatpush2.bf16.msra.mxu0 0
  %367 = vmatprep.subr.bf16.mxu0 0
  %368 = vmatpush2.bf16.msra.mxu0 0
  %369 = vmatprep.subr.bf16.mxu0 0
  %370 = vmatpush2.bf16.msra.mxu0 0
  %371 = vmatprep.subr.bf16.mxu0 0
  %372 = vmatpush2.bf16.msra.mxu0 0
  %373 = vmatprep.subr.bf16.mxu0 0
  %374 = vmatpush2.bf16.msra.mxu0 0
  %375 = vmatprep.mubr.bf16.mxu0 0
  %376 = vmatmul.mubr.bf16.gmra.mxu0 %v338
  %v377 = vpop.f32.mrf.mxu0
  %v378 = vadd.f32 0.0, %v377
  %v379 = vpop.f32.mrf.mxu0
  %v380 = vpop.f32.mrf.mxu0
  %v381 = vadd.f32 0.0, %v380
  %v382 = vpop.f32.mrf.mxu0
  %383 = vmatprep.mubr.bf16.mxu0 0
  %384 = vmatmul.mubr.bf16.gmra.mxu0 %v341
  %v385 = vpop.f32.mrf.mxu0
  %v386 = vadd.f32 0.0, %v385
  %v387 = vpop.f32.mrf.mxu0
  %v388 = vpop.f32.mrf.mxu0
  %v389 = vadd.f32 0.0, %v388
  %v390 = vpop.f32.mrf.mxu0
  %391 = vdwg.mxu0
  %v392 = vmul.f32 %v240, %v378
  %v393 = vmul.f32 %v243, %v381
  %v394 = vmul.f32 %v248, %v386
  %v395 = vmul.f32 %v251, %v389
  %v396 = vmax.f32 %v392, 1e-16
  %v397 = vmax.f32 %v393, 1e-16
  %v398 = vmax.f32 %v394, 1e-16
  %v399 = vmax.f32 %v395, 1e-16
  %v400 = vrsqrt.pop %v396
  %v401 = vrsqrt.pop %v397
  %v402 = vrsqrt.pop %v398
  %v403 = vrsqrt.pop %v399
  %v404 = vmul.f32 %v317, %v400
  %v405 = vmul.f32 %v320, %v401
  %v406 = vmul.f32 %v325, %v402
  %v407 = vmul.f32 %v328, %v403
  %v408 = vand.u32 2147483647, %v404
  %v409 = vand.u32 2147483647, %v405
  %v410 = vand.u32 2147483647, %v406
  %v411 = vand.u32 2147483647, %v407
  %v412 = vmul.f32 %v408, 1.442695
  %v413 = vpow.pop %v412
  %v414 = vmul.f32 %v409, 1.442695
  %v415 = vpow.pop %v414
  %v416 = vmul.f32 %v410, 1.442695
  %v417 = vpow.pop %v416
  %v418 = vmul.f32 %v411, 1.442695
  %v419 = vpow.pop %v418
  %v420 = vpack.c.bf16 %v415, %v413
  %v421 = vpack.c.bf16 %v419, %v417
  %v422 = vld [vmem:[%s8] sm:$0xf]
  %vm423 = vcmask 64512
  %v425 = vsel %vm423, %v420, 0
  %v428 = vsel %vm423, %v421, 0
  %vm430 = vcmask 1043456
  %v432 = vsel %vm430, %v422, 0
  %434 = vmatprep.subr.bf16.mxu0 0
  %435 = vmatpush1.bf16.msra.mxu0 0
  %436 = vmatprep.subr.bf16.mxu0 0
  %437 = vmatpush1.bf16.msra.mxu0 0
  %438 = vmatprep.subr.bf16.mxu0 0
  %439 = vmatpush1.bf16.msra.mxu0 0
  %440 = vmatprep.subr.bf16.mxu0 0
  %441 = vmatpush1.bf16.msra.mxu0 0
  %442 = vmatprep.subr.bf16.mxu0 0
  %443 = vmatpush1.bf16.msra.mxu0 0
  %444 = vmatprep.subr.bf16.mxu0 0
  %445 = vmatpush1.bf16.msra.mxu0 0
  %446 = vmatprep.subr.bf16.mxu0 0
  %447 = vmatpush1.bf16.msra.mxu0 0
  %448 = vmatprep.subr.bf16.mxu0 0
  %449 = vmatpush1.bf16.msra.mxu0 %v432
  %450 = vmatprep.subr.bf16.mxu0 0
  %451 = vmatpush2.bf16.msra.mxu0 0
  %452 = vmatprep.subr.bf16.mxu0 0
  %453 = vmatpush2.bf16.msra.mxu0 0
  %454 = vmatprep.subr.bf16.mxu0 0
  %455 = vmatpush2.bf16.msra.mxu0 0
  %456 = vmatprep.subr.bf16.mxu0 0
  %457 = vmatpush2.bf16.msra.mxu0 0
  %458 = vmatprep.subr.bf16.mxu0 0
  %459 = vmatpush2.bf16.msra.mxu0 0
  %460 = vmatprep.subr.bf16.mxu0 0
  %461 = vmatpush2.bf16.msra.mxu0 0
  %462 = vmatprep.subr.bf16.mxu0 0
  %463 = vmatpush2.bf16.msra.mxu0 0
  %464 = vmatprep.subr.bf16.mxu0 0
  %465 = vmatpush2.bf16.msra.mxu0 0
  %466 = vmatprep.mubr.bf16.mxu0 0
  %467 = vmatmul.mubr.bf16.gmra.mxu0 %v425
  %v468 = vpop.f32.mrf.mxu0
  %v469 = vadd.f32 0.0, %v468
  %v470 = vpop.f32.mrf.mxu0
  %v471 = vpop.f32.mrf.mxu0
  %v472 = vadd.f32 0.0, %v471
  %v473 = vpop.f32.mrf.mxu0
  %474 = vmatprep.mubr.bf16.mxu0 0
  %475 = vmatmul.mubr.bf16.gmra.mxu0 %v428
  %v476 = vpop.f32.mrf.mxu0
  %v477 = vadd.f32 0.0, %v476
  %v478 = vpop.f32.mrf.mxu0
  %v479 = vpop.f32.mrf.mxu0
  %v480 = vadd.f32 0.0, %v479
  %v481 = vpop.f32.mrf.mxu0
  %482 = vdwg.mxu0
  %487 = vrot.lane.b32.xlu0 %v116, 96
  %v488 = vpop.permute.xlu0 %487
  %489 = vrot.lane.b32.xlu0 %v119, 96
  %v490 = vpop.permute.xlu0 %489
  %491 = vrot.lane.b32.xlu0 %v124, 96
  %v492 = vpop.permute.xlu0 %491
  %493 = vrot.lane.b32.xlu0 %v127, 96
  %v494 = vpop.permute.xlu0 %493
  %v499 = vmul.f32 %v469, %v488
  %v500 = vmul.f32 %v472, %v490
  %v501 = vmul.f32 %v477, %v492
  %v502 = vmul.f32 %v480, %v494
  %v503 = vpack.c.bf16 %v500, %v499
  %v504 = vpack.c.bf16 %v502, %v501
  %v505 = vld [vmem:[%s3] sm:$0x3]
  %v507 = vsel %vm74, %v505, 0
  %509 = vmatprep.subr.bf16.mxu0 0
  %510 = vmatpush1.bf16.msra.mxu0 0
  %511 = vmatprep.subr.bf16.mxu0 0
  %512 = vmatpush1.bf16.msra.mxu0 0
  %513 = vmatprep.subr.bf16.mxu0 0
  %514 = vmatpush1.bf16.msra.mxu0 0
  %515 = vmatprep.subr.bf16.mxu0 0
  %516 = vmatpush1.bf16.msra.mxu0 0
  %517 = vmatprep.subr.bf16.mxu0 0
  %518 = vmatpush1.bf16.msra.mxu0 0
  %519 = vmatprep.subr.bf16.mxu0 0
  %520 = vmatpush1.bf16.msra.mxu0 0
  %521 = vmatprep.subr.bf16.mxu0 0
  %522 = vmatpush1.bf16.msra.mxu0 %v504
  %523 = vmatprep.subr.bf16.mxu0 0
  %524 = vmatpush1.bf16.msra.mxu0 %v503
  %525 = vmatprep.subr.bf16.mxu0 0
  %526 = vmatpush2.bf16.msra.mxu0 0
  %527 = vmatprep.subr.bf16.mxu0 0
  %528 = vmatpush2.bf16.msra.mxu0 0
  %529 = vmatprep.subr.bf16.mxu0 0
  %530 = vmatpush2.bf16.msra.mxu0 0
  %531 = vmatprep.subr.bf16.mxu0 0
  %532 = vmatpush2.bf16.msra.mxu0 0
  %533 = vmatprep.subr.bf16.mxu0 0
  %534 = vmatpush2.bf16.msra.mxu0 0
  %535 = vmatprep.subr.bf16.mxu0 0
  %536 = vmatpush2.bf16.msra.mxu0 0
  %537 = vmatprep.subr.bf16.mxu0 0
  %538 = vmatpush2.bf16.msra.mxu0 0
  %539 = vmatprep.subr.bf16.mxu0 0
  %540 = vmatpush2.bf16.msra.mxu0 0
  %541 = vmatprep.mubr.bf16.mxu0 0
  %542 = vmatmul.mubr.bf16.gmra.mxu0 %v507
  %v543 = vpop.f32.mrf.mxu0
  %v544 = vadd.f32 0.0, %v543
  %v545 = vpop.f32.mrf.mxu0
  %v546 = vpop.f32.mrf.mxu0
  %v547 = vpop.f32.mrf.mxu0
  %548 = vdwg.mxu0
  %vm549 = vcmask 256000
  %550 = vst.msk [vmem:[%s9] sm:$0x7] %vm549, %v544
  // Predicated region
  $region38: #{bert_pool_forward.1} parent=0 // pred_check
    _
  $region39: #{bert_pool_forward.1} parent=0 // pred_check_branch
    %552 = sbr.rel (0) target = $region41
  $region40: #{bert_pool_forward.1} parent=0 // pred_region
    _
  $region41: #{bert_pool_forward.1} parent=0 // pred_fallthru
    _
  // Predicated region
  $region42: #{bert_pool_forward.1} parent=0 // pred_check
    _
  $region43: #{bert_pool_forward.1} parent=0 // pred_check_branch
    %554 = sbr.rel (0) target = $region45
  $region44: #{bert_pool_forward.1} parent=0 // pred_region
    _
  $region45: #{bert_pool_forward.1} parent=0 // pred_fallthru
    _

</llo_original>
